<compile_context>
chip_gen: v5e
topology: v5e:2x2
jax: 0.10.0
libtpu: 0.0.40
codegen_flags: <defaults>
</compile_context>

<pallas_src>
import jax
import jax.numpy as jnp
from jax.experimental import pallas as pl
from jax.experimental.pallas import tpu as pltpu


# ---------------------------------------------------------------------------
# Pass A: per-(t, b) quantities that do not depend on the recurrent memory.
# ---------------------------------------------------------------------------
def precompute_kernel(q_ref, qau_ref, keyT_ref, we_ref, be_ref, wa_ref, ba_ref,
                      w_ref, e_ref, a_ref):
    q = q_ref[...]                                   # (TM, K)
    qau = qau_ref[...]                               # (TM, V + U)

    # correlation weight: softmax(q @ key^T) over concepts
    sim = jnp.dot(q, keyT_ref[...], preferred_element_type=jnp.float32)   # (TM, C)
    sim = sim - jnp.max(sim, axis=1, keepdims=True)
    ex = jnp.exp(sim)
    inv = pl.reciprocal(jnp.sum(ex, axis=1, keepdims=True), approx=True)
    w_ref[...] = ex * inv

    # erase / add gates from concat([qa, u])
    e_lin = jnp.dot(qau, we_ref[...], preferred_element_type=jnp.float32) + be_ref[...]
    a_lin = jnp.dot(qau, wa_ref[...], preferred_element_type=jnp.float32) + ba_ref[...]
    e_ref[...] = jax.nn.sigmoid(e_lin)
    a_ref[...] = jnp.tanh(a_lin)


# ---------------------------------------------------------------------------
# Pass B: sequential value-memory recurrence (pure VPU elementwise work).
# ---------------------------------------------------------------------------
def recurrence_kernel(w_ref, e_ref, a_ref, vm0_ref, reads_ref, vm_scratch):
    # new batch tile -> (re)load its initial value memory
    @pl.when(pl.program_id(1) == 0)
    def _():
        vm_scratch[...] = vm0_ref[...]

    T = w_ref.shape[0]

    def body(t, carry):
        vm = vm_scratch[...]                         # (Bt, C, V)
        w_t = w_ref[t][:, :, None]                   # (Bt, C, 1)
        reads_ref[t] = jnp.sum(vm * w_t, axis=1)     # (Bt, V)
        e_t = e_ref[t][:, None, :]                   # (Bt, 1, V)
        a_t = a_ref[t][:, None, :]                   # (Bt, 1, V)
        vm_scratch[...] = vm * (1.0 - e_t * w_t) + a_t * w_t
        return carry

    jax.lax.fori_loop(0, T, body, 0, unroll=True)


# ---------------------------------------------------------------------------
# Pass C: layernorm + MLP head, batched over all (t, b) rows.
# ---------------------------------------------------------------------------
def head_kernel(x_ref, w1_ref, w2_ref, vec_ref, out_ref):
    x = x_ref[...]                                   # (TM, D) f32
    vec = vec_ref[...]                               # (8, D) packed small params
    gamma, beta = vec[0:1], vec[1:2]
    b1, b2, wout = vec[2:3], vec[3:4], vec[4:5]
    bout = vec[5:6, 0:1]                             # (1, 1)

    # layer norm (two-pass: mean, then centered variance)
    mean = jnp.mean(x, axis=1, keepdims=True)
    xc = x - mean
    var = jnp.mean(xc * xc, axis=1, keepdims=True)
    y = xc * jax.lax.rsqrt(var + 1e-5) * gamma + beta

    # linear1 -> relu -> (dropout = identity in eval) -> linear2 -> linear_out
    h = jnp.dot(y.astype(jnp.bfloat16), w1_ref[...],
                preferred_element_type=jnp.float32) + b1
    h = jnp.maximum(h, 0.0)
    h2 = jnp.dot(h.astype(jnp.bfloat16), w2_ref[...],
                 preferred_element_type=jnp.float32) + b2
    logit = jnp.sum(h2 * wout, axis=1, keepdims=True) + bout
    out_ref[...] = jax.nn.sigmoid(logit)


def _row_tile(n, cap=512):
    """Largest row tile (multiple of 8, or full extent) that divides n."""
    if n <= cap:
        return n
    for t in (512, 256, 128, 64, 32, 16, 8):
        if n % t == 0:
            return t
    return n


def llpkt_forward(q_data, qa_data, users, p, *, C, K, V, U, t_chunk=8):
    B, L = q_data.shape
    D = U + V + K

    # ---- embedding lookups (glue, plain JAX) ----
    q_emb = p["q_table"][q_data]                     # (B, L, K)
    qa_emb = p["qa_table"][qa_data]                  # (B, L, V)
    u_emb = p["u_table"][users]                      # (B, U)
    init_vm = p["init_vm_table"][users].reshape(B, C, V)
    keyT = p["key_table"][1:].T                      # (K, C), concept ids 1..C

    # time-major layout; pad the time axis up to a multiple of the chunk size.
    T = min(t_chunk, L)
    L_pad = ((L + T - 1) // T) * T
    q_seq = jnp.transpose(q_emb, (1, 0, 2))          # (L, B, K)
    qa_seq = jnp.transpose(qa_emb, (1, 0, 2))        # (L, B, V)
    if L_pad != L:
        q_seq = jnp.pad(q_seq, ((0, L_pad - L), (0, 0), (0, 0)))
        qa_seq = jnp.pad(qa_seq, ((0, L_pad - L), (0, 0), (0, 0)))

    R = L_pad * B
    TM = _row_tile(R)
    qf = q_seq.reshape(R, K)
    uf = jnp.broadcast_to(u_emb[None], (L_pad, B, U)).reshape(R, U)
    qauf = jnp.concatenate([qa_seq.reshape(R, V), uf], axis=1)   # (R, V+U)

    full2 = lambda shp: pl.BlockSpec(shp, lambda i: (0, 0))
    row2 = lambda d: pl.BlockSpec((TM, d), lambda i: (i, 0))

    # ---- Pass A: w / erase / add, batched over all L*B rows ----
    w_flat, e_flat, a_flat = pl.pallas_call(
        precompute_kernel,
        out_shape=(jax.ShapeDtypeStruct((R, C), jnp.float32),
                   jax.ShapeDtypeStruct((R, V), jnp.float32),
                   jax.ShapeDtypeStruct((R, V), jnp.float32)),
        grid=(R // TM,),
        in_specs=[row2(K), row2(V + U),
                  full2((K, C)),
                  full2((V + U, V)), full2((1, V)),
                  full2((V + U, V)), full2((1, V))],
        out_specs=(row2(C), row2(V), row2(V)),
        compiler_params=pltpu.CompilerParams(
            dimension_semantics=("parallel",)),
    )(qf, qauf, keyT, p["We"], p["be"], p["Wa"], p["ba"])

    w_seq = w_flat.reshape(L_pad, B, C)
    e_seq = e_flat.reshape(L_pad, B, V)
    a_seq = a_flat.reshape(L_pad, B, V)

    # ---- Pass B: sequential memory recurrence; batch axis parallel ----
    Bt = B // 2 if (B % 16 == 0) else B              # <=2 batch tiles (1 per TC on v7x)
    reads = pl.pallas_call(
        recurrence_kernel,
        out_shape=jax.ShapeDtypeStruct((L_pad, B, V), jnp.float32),
        grid=(B // Bt, L_pad // T),
        in_specs=[pl.BlockSpec((T, Bt, C), lambda b, i: (i, b, 0)),
                  pl.BlockSpec((T, Bt, V), lambda b, i: (i, b, 0)),
                  pl.BlockSpec((T, Bt, V), lambda b, i: (i, b, 0)),
                  pl.BlockSpec((Bt, C, V), lambda b, i: (b, 0, 0))],
        out_specs=pl.BlockSpec((T, Bt, V), lambda b, i: (i, b, 0)),
        scratch_shapes=[pltpu.VMEM((Bt, C, V), jnp.float32)],
        compiler_params=pltpu.CompilerParams(
            dimension_semantics=("parallel", "arbitrary")),
    )(w_seq, e_seq, a_seq, init_vm)

    # ---- Pass C: layernorm + MLP head over all L*B rows ----
    x = jnp.concatenate([uf, reads.reshape(R, V), qf], axis=1)   # (R, D)
    vec = jnp.zeros((8, D), jnp.float32)
    vec = (vec.at[0].set(p["gamma"][0]).at[1].set(p["beta"][0])
              .at[2].set(p["b1"][0]).at[3].set(p["b2"][0])
              .at[4].set(p["wout"][0]).at[5, 0].set(p["bout"][0]))

    preds = pl.pallas_call(
        head_kernel,
        out_shape=jax.ShapeDtypeStruct((R, 1), jnp.float32),
        grid=(R // TM,),
        in_specs=[row2(D),
                  full2((D, D)), full2((D, D)),
                  full2((8, D))],
        out_specs=pl.BlockSpec((TM, 1), lambda i: (i, 0)),
        compiler_params=pltpu.CompilerParams(
            dimension_semantics=("parallel",)),
    )(x, p["W1"].astype(jnp.bfloat16), p["W2"].astype(jnp.bfloat16), vec)

    return preds.reshape(L_pad, B)[:L].T             # (B, L)


def llpkt_reference(q_data, qa_data, users, p, *, C, K, V, U):
    """Pure-JAX reference mirroring the PyTorch forward (online mode, eval)."""
    B, L = q_data.shape
    q_emb = p["q_table"][q_data]
    qa_emb = p["qa_table"][qa_data]
    u_emb = p["u_table"][users]
    vm0 = p["init_vm_table"][users].reshape(B, C, V)
    key_mat = p["key_table"][1:]
    gamma, beta = p["gamma"], p["beta"]
    W1, b1, W2, b2 = p["W1"], p["b1"], p["W2"], p["b2"]
    wout, bout = p["wout"], p["bout"]
    We, be, Wa, ba = p["We"], p["be"], p["Wa"], p["ba"]

    def step(vm, xs):
        q, qa = xs
        w = jax.nn.softmax(q @ key_mat.T, axis=1)
        read = jnp.sum(vm * w[:, :, None], axis=1)
        x = jnp.concatenate([u_emb, read, q], axis=1)
        mean = x.mean(axis=1, keepdims=True)
        var = x.var(axis=1, keepdims=True)
        y = (x - mean) / jnp.sqrt(var + 1e-5) * gamma + beta
        h = jax.nn.relu(y @ W1 + b1)
        h2 = h @ W2 + b2
        pred = jax.nn.sigmoid(jnp.sum(h2 * wout, axis=1) + bout[0])
        ui = jnp.concatenate([qa, u_emb], axis=1)
        erase = jax.nn.sigmoid(ui @ We + be)
        add = jnp.tanh(ui @ Wa + ba)
        vm_new = (vm * (1.0 - erase[:, None, :] * w[:, :, None])
                  + add[:, None, :] * w[:, :, None])
        return vm_new, pred

    _, preds = jax.lax.scan(
        step, vm0,
        (jnp.transpose(q_emb, (1, 0, 2)), jnp.transpose(qa_emb, (1, 0, 2))))
    return preds.T                                   # (B, L)


def init_params(rng, *, num_users, num_questions, C, K, V, U):
    D = U + V + K
    ks = jax.random.split(rng, 16)
    n = lambda k, shp, s: (jax.random.normal(k, shp, jnp.float32) * s)
    p = {}
    # embedding tables (row 0 is the padding row -> zeros where padding_idx=0)
    p["key_table"] = n(ks[0], (C + 1, K), (2.0 / K) ** 0.5)
    p["init_vm_table"] = n(ks[1], (num_users + 1, C * V), 0.2).at[0].set(0.0)
    p["u_table"] = n(ks[2], (num_users + 1, U), 1.0).at[0].set(0.0)
    p["q_table"] = n(ks[3], (num_questions + 1, K), 1.0).at[0].set(0.0)
    p["qa_table"] = n(ks[4], (2 * num_questions + 1, V), 1.0).at[0].set(0.0)
    # layer_norm1
    p["gamma"] = jnp.ones((1, D), jnp.float32)
    p["beta"] = jnp.zeros((1, D), jnp.float32)
    # linear1 / linear2 / linear_out (stored as (in, out))
    p["W1"] = n(ks[5], (D, D), 0.05)
    p["b1"] = n(ks[6], (1, D), 0.01)
    p["W2"] = n(ks[7], (D, D), 0.05)
    p["b2"] = n(ks[8], (1, D), 0.01)
    p["wout"] = n(ks[9], (1, D), 0.05)
    p["bout"] = jnp.array([0.05], jnp.float32)
    # erase / add linears, input is concat([qa (V), u (U)]) -> (V+U, V)
    p["We"] = n(ks[10], (V + U, V), 0.05)
    p["be"] = n(ks[11], (1, V), 0.01)
    p["Wa"] = n(ks[12], (V + U, V), 0.05)
    p["ba"] = n(ks[13], (1, V), 0.01)
    return p


if __name__ == "__main__":
    B, L = 8, 8            # batch, seq_len
    C = 8                  # num_concepts
    H = 32                 # hidden_dim -> key_dim = value_dim = 32
    U = 16                 # user_embed_dim
    num_users, num_questions = 5, 20
    K = V = H

    rng = jax.random.PRNGKey(0)
    k1, k2, k3, kp = jax.random.split(rng, 4)
    q_data = jax.random.randint(k1, (B, L), 1, num_questions + 1)
    qa_data = jax.random.randint(k2, (B, L), 1, 2 * num_questions + 1)
    users = jax.random.randint(k3, (B,), 1, num_users + 1)

    params = init_params(kp, num_users=num_users, num_questions=num_questions,
                         C=C, K=K, V=V, U=U)

    out = llpkt_forward(q_data, qa_data, users, params, C=C, K=K, V=V, U=U)
    out = jax.block_until_ready(out)

    ref = llpkt_reference(q_data, qa_data, users, params, C=C, K=K, V=V, U=U)
    assert out.shape == (B, L)
    assert jnp.allclose(out, ref, atol=1e-2, rtol=1e-2), (out, ref)
    print("KERNEL_OK")
</pallas_src>

<mosaic_0001>
module attributes {stable_mosaic.version = 11 : i64} {
  func.func @precompute_kernel(%arg0: i32, %arg1: memref<64x32xf32, #tpu.memory_space<vmem>>, %arg2: memref<64x48xf32, #tpu.memory_space<vmem>>, %arg3: memref<32x8xf32, #tpu.memory_space<vmem>>, %arg4: memref<48x32xf32, #tpu.memory_space<vmem>>, %arg5: memref<1x32xf32, #tpu.memory_space<vmem>>, %arg6: memref<48x32xf32, #tpu.memory_space<vmem>>, %arg7: memref<1x32xf32, #tpu.memory_space<vmem>>, %arg8: memref<64x8xf32, #tpu.memory_space<vmem>>, %arg9: memref<64x32xf32, #tpu.memory_space<vmem>>, %arg10: memref<64x32xf32, #tpu.memory_space<vmem>>) attributes {dimension_semantics = [#tpu.dimension_semantics<parallel>], iteration_bounds = array<i64: 1>, scalar_prefetch = 0 : i64, scratch_operands = 0 : i64, tpu.core_type = #tpu.core_type<tc>, window_params = [{transform_indices = @transform_0, window_bounds = array<i64: 64, 32>}, {transform_indices = @transform_1, window_bounds = array<i64: 64, 48>}, {pipeline_mode = #tpu.pipeline_mode<synchronous>, transform_indices = @transform_2, window_bounds = array<i64: 32, 8>}, {pipeline_mode = #tpu.pipeline_mode<synchronous>, transform_indices = @transform_3, window_bounds = array<i64: 48, 32>}, {pipeline_mode = #tpu.pipeline_mode<synchronous>, transform_indices = @transform_4, window_bounds = array<i64: 1, 32>}, {pipeline_mode = #tpu.pipeline_mode<synchronous>, transform_indices = @transform_5, window_bounds = array<i64: 48, 32>}, {pipeline_mode = #tpu.pipeline_mode<synchronous>, transform_indices = @transform_6, window_bounds = array<i64: 1, 32>}, {transform_indices = @transform_7, window_bounds = array<i64: 64, 8>}, {transform_indices = @transform_8, window_bounds = array<i64: 64, 32>}, {transform_indices = @transform_9, window_bounds = array<i64: 64, 32>}]} {
    %c0 = arith.constant 0 : index
    %c0_0 = arith.constant 0 : index
    %0 = vector.load %arg1[%c0, %c0_0] : memref<64x32xf32, #tpu.memory_space<vmem>>, vector<64x32xf32>
    %c0_1 = arith.constant 0 : index
    %c0_2 = arith.constant 0 : index
    %1 = vector.load %arg2[%c0_1, %c0_2] : memref<64x48xf32, #tpu.memory_space<vmem>>, vector<64x48xf32>
    %c0_3 = arith.constant 0 : index
    %c0_4 = arith.constant 0 : index
    %2 = vector.load %arg3[%c0_3, %c0_4] : memref<32x8xf32, #tpu.memory_space<vmem>>, vector<32x8xf32>
    %cst = arith.constant dense<0.000000e+00> : vector<64x8xf32>
    %3 = tpu.matmul %0, %2, %cst {dimension_numbers = #tpu.dot_dimension_numbers<[1], [0], [0], [1], [0, 0, 1, 1], [], []>} : vector<64x32xf32>, vector<32x8xf32>, vector<64x8xf32> -> vector<64x8xf32>
    %cst_5 = arith.constant dense<0xFF800000> : vector<64xf32>
    %4 = vector.multi_reduction <maximumf>, %3, %cst_5 [1] : vector<64x8xf32> to vector<64xf32>
    %5 = vector.shape_cast %4 : vector<64xf32> to vector<64x1xf32>
    %6 = vector.broadcast %5 : vector<64x1xf32> to vector<64x8xf32>
    %7 = arith.subf %3, %6 : vector<64x8xf32>
    %8 = math.exp %7 : vector<64x8xf32>
    %cst_6 = arith.constant dense<0.000000e+00> : vector<64xf32>
    %9 = vector.multi_reduction <add>, %8, %cst_6 [1] : vector<64x8xf32> to vector<64xf32>
    %10 = vector.shape_cast %9 : vector<64xf32> to vector<64x1xf32>
    %11 = tpu.reciprocal %10 {approx = true} : vector<64x1xf32> -> vector<64x1xf32>
    %12 = vector.broadcast %11 : vector<64x1xf32> to vector<64x8xf32>
    %13 = arith.mulf %8, %12 : vector<64x8xf32>
    %c0_7 = arith.constant 0 : index
    %c0_8 = arith.constant 0 : index
    %14 = vector.load %arg8[%c0_7, %c0_8] : memref<64x8xf32, #tpu.memory_space<vmem>>, vector<64x8xf32>
    tpu.vector_store %arg8[%c0_7, %c0_8], %13 {strides = array<i32>} : memref<64x8xf32, #tpu.memory_space<vmem>>, vector<64x8xf32>,
    %c0_9 = arith.constant 0 : index
    %c0_10 = arith.constant 0 : index
    %15 = vector.load %arg4[%c0_9, %c0_10] : memref<48x32xf32, #tpu.memory_space<vmem>>, vector<48x32xf32>
    %cst_11 = arith.constant dense<0.000000e+00> : vector<64x32xf32>
    %16 = tpu.matmul %1, %15, %cst_11 {dimension_numbers = #tpu.dot_dimension_numbers<[1], [0], [0], [1], [0, 0, 1, 1], [], []>} : vector<64x48xf32>, vector<48x32xf32>, vector<64x32xf32> -> vector<64x32xf32>
    %c0_12 = arith.constant 0 : index
    %c0_13 = arith.constant 0 : index
    %17 = vector.load %arg5[%c0_12, %c0_13] : memref<1x32xf32, #tpu.memory_space<vmem>>, vector<1x32xf32>
    %18 = vector.broadcast %17 : vector<1x32xf32> to vector<64x32xf32>
    %19 = arith.addf %16, %18 : vector<64x32xf32>
    %c0_14 = arith.constant 0 : index
    %c0_15 = arith.constant 0 : index
    %20 = vector.load %arg6[%c0_14, %c0_15] : memref<48x32xf32, #tpu.memory_space<vmem>>, vector<48x32xf32>
    %cst_16 = arith.constant dense<0.000000e+00> : vector<64x32xf32>
    %21 = tpu.matmul %1, %20, %cst_16 {dimension_numbers = #tpu.dot_dimension_numbers<[1], [0], [0], [1], [0, 0, 1, 1], [], []>} : vector<64x48xf32>, vector<48x32xf32>, vector<64x32xf32> -> vector<64x32xf32>
    %c0_17 = arith.constant 0 : index
    %c0_18 = arith.constant 0 : index
    %22 = vector.load %arg7[%c0_17, %c0_18] : memref<1x32xf32, #tpu.memory_space<vmem>>, vector<1x32xf32>
    %23 = vector.broadcast %22 : vector<1x32xf32> to vector<64x32xf32>
    %24 = arith.addf %21, %23 : vector<64x32xf32>
    %25 = arith.negf %19 : vector<64x32xf32>
    %26 = math.exp %25 : vector<64x32xf32>
    %cst_19 = arith.constant 1.000000e+00 : f32
    %27 = vector.broadcast %cst_19 : f32 to vector<64x32xf32>
    %28 = arith.addf %27, %26 : vector<64x32xf32>
    %29 = arith.divf %27, %28 : vector<64x32xf32>
    %c0_20 = arith.constant 0 : index
    %c0_21 = arith.constant 0 : index
    %30 = vector.load %arg9[%c0_20, %c0_21] : memref<64x32xf32, #tpu.memory_space<vmem>>, vector<64x32xf32>
    tpu.vector_store %arg9[%c0_20, %c0_21], %29 {strides = array<i32>} : memref<64x32xf32, #tpu.memory_space<vmem>>, vector<64x32xf32>,
    %31 = math.tanh %24 : vector<64x32xf32>
    %c0_22 = arith.constant 0 : index
    %c0_23 = arith.constant 0 : index
    %32 = vector.load %arg10[%c0_22, %c0_23] : memref<64x32xf32, #tpu.memory_space<vmem>>, vector<64x32xf32>
    tpu.vector_store %arg10[%c0_22, %c0_23], %31 {strides = array<i32>} : memref<64x32xf32, #tpu.memory_space<vmem>>, vector<64x32xf32>,
    return
  }
  func.func @transform_0(%arg0: i32) -> (i32, i32) {
    %c0_i32 = arith.constant 0 : i32
    %c0_i32_0 = arith.constant 0 : i32
    return %arg0, %c0_i32 : i32, i32
  }
  func.func @transform_1(%arg0: i32) -> (i32, i32) {
    %c0_i32 = arith.constant 0 : i32
    %c0_i32_0 = arith.constant 0 : i32
    return %arg0, %c0_i32 : i32, i32
  }
  func.func @transform_2(%arg0: i32) -> (i32, i32) {
    %c0_i32 = arith.constant 0 : i32
    %c0_i32_0 = arith.constant 0 : i32
    %c0_i32_1 = arith.constant 0 : i32
    return %c0_i32, %c0_i32_0 : i32, i32
  }
  func.func @transform_3(%arg0: i32) -> (i32, i32) {
    %c0_i32 = arith.constant 0 : i32
    %c0_i32_0 = arith.constant 0 : i32
    %c0_i32_1 = arith.constant 0 : i32
    return %c0_i32, %c0_i32_0 : i32, i32
  }
  func.func @transform_4(%arg0: i32) -> (i32, i32) {
    %c0_i32 = arith.constant 0 : i32
    %c0_i32_0 = arith.constant 0 : i32
    %c0_i32_1 = arith.constant 0 : i32
    return %c0_i32, %c0_i32_0 : i32, i32
  }
  func.func @transform_5(%arg0: i32) -> (i32, i32) {
    %c0_i32 = arith.constant 0 : i32
    %c0_i32_0 = arith.constant 0 : i32
    %c0_i32_1 = arith.constant 0 : i32
    return %c0_i32, %c0_i32_0 : i32, i32
  }
  func.func @transform_6(%arg0: i32) -> (i32, i32) {
    %c0_i32 = arith.constant 0 : i32
    %c0_i32_0 = arith.constant 0 : i32
    %c0_i32_1 = arith.constant 0 : i32
    return %c0_i32, %c0_i32_0 : i32, i32
  }
  func.func @transform_7(%arg0: i32) -> (i32, i32) {
    %c0_i32 = arith.constant 0 : i32
    %c0_i32_0 = arith.constant 0 : i32
    return %arg0, %c0_i32 : i32, i32
  }
  func.func @transform_8(%arg0: i32) -> (i32, i32) {
    %c0_i32 = arith.constant 0 : i32
    %c0_i32_0 = arith.constant 0 : i32
    return %arg0, %c0_i32 : i32, i32
  }
  func.func @transform_9(%arg0: i32) -> (i32, i32) {
    %c0_i32 = arith.constant 0 : i32
    %c0_i32_0 = arith.constant 0 : i32
    return %arg0, %c0_i32 : i32, i32
  }
}

</mosaic_0001>

<llo_original>
// kernel: tpu_custom_call.1
$region0: #{tpu_custom_call.1}
  #allocation0 [shape = 'u32[]', space=smem, size = 0x4, offset = 0x4, fixed_abs, tag = 'smem constant byte address 0x4 - core index']
  #allocation1 [shape = 'u32[72,128]{1,0:T(1,128)}', space=vmem, size = 0x9000, scoped, tag = 'internal scratch']
  %s0 = inlined_call_operand.vmem [shape: f32[64,32], index: 0, kind: input, shape index: {}]
  %s1 = inlined_call_operand.vmem [shape: f32[64,48], index: 1, kind: input, shape index: {}]
  %s2 = inlined_call_operand.vmem [shape: f32[32,8], index: 2, kind: input, shape index: {}]
  %s3 = inlined_call_operand.vmem [shape: f32[48,32], index: 3, kind: input, shape index: {}]
  %s4 = inlined_call_operand.vmem [shape: f32[1,32], index: 4, kind: input, shape index: {}]
  %s5 = inlined_call_operand.vmem [shape: f32[48,32], index: 5, kind: input, shape index: {}]
  %s6 = inlined_call_operand.vmem [shape: f32[1,32], index: 6, kind: input, shape index: {}]
  %s7 = inlined_call_operand.vmem [shape: f32[64,8], index: 7, kind: output, shape index: {0}]
  %s8 = inlined_call_operand.vmem [shape: f32[64,32], index: 8, kind: output, shape index: {1}]
  %s9 = inlined_call_operand.vmem [shape: f32[64,32], index: 9, kind: output, shape index: {2}]
  %10 = xla_tuple %s7, %s8, %s9
  %s11 = sld [smem:[#allocation0]]
  $region54: #{tpu_custom_call.1} parent=0
    _
  %s13 = ssub.s32 1, %s11
  %s14 = scalar_select 0, %s13, %s11
  // Predicated region
  $region2: #{tpu_custom_call.1} parent=0 // pred_check
    _
  $region3: #{tpu_custom_call.1} parent=0 // pred_check_branch
    %16 = sbr.rel (0) target = $region5
  $region4: #{tpu_custom_call.1} parent=0 // pred_region
    _
  $region5: #{tpu_custom_call.1} parent=0 // pred_fallthru
    _
  // Predicated region
  $region6: #{tpu_custom_call.1} parent=0 // pred_check
    _
  $region7: #{tpu_custom_call.1} parent=0 // pred_check_branch
    %18 = sbr.rel (0) target = $region9
  $region8: #{tpu_custom_call.1} parent=0 // pred_region
    _
  $region9: #{tpu_custom_call.1} parent=0 // pred_fallthru
    _
  // Predicated region
  $region10: #{tpu_custom_call.1} parent=0 // pred_check
    _
  $region11: #{tpu_custom_call.1} parent=0 // pred_check_branch
    %20 = sbr.rel (0) target = $region13
  $region12: #{tpu_custom_call.1} parent=0 // pred_region
    _
  $region13: #{tpu_custom_call.1} parent=0 // pred_fallthru
    _
  // Predicated region
  $region14: #{tpu_custom_call.1} parent=0 // pred_check
    _
  $region15: #{tpu_custom_call.1} parent=0 // pred_check_branch
    %22 = sbr.rel (0) target = $region17
  $region16: #{tpu_custom_call.1} parent=0 // pred_region
    _
  $region17: #{tpu_custom_call.1} parent=0 // pred_fallthru
    _
  // Predicated region
  $region18: #{tpu_custom_call.1} parent=0 // pred_check
    _
  $region19: #{tpu_custom_call.1} parent=0 // pred_check_branch
    %24 = sbr.rel (0) target = $region21
  $region20: #{tpu_custom_call.1} parent=0 // pred_region
    _
  $region21: #{tpu_custom_call.1} parent=0 // pred_fallthru
    _
  // Predicated region
  $region22: #{tpu_custom_call.1} parent=0 // pred_check
    _
  $region23: #{tpu_custom_call.1} parent=0 // pred_check_branch
    %26 = sbr.rel (0) target = $region25
  $region24: #{tpu_custom_call.1} parent=0 // pred_region
    _
  $region25: #{tpu_custom_call.1} parent=0 // pred_fallthru
    _
  // Predicated region
  $region26: #{tpu_custom_call.1} parent=0 // pred_check
    _
  $region27: #{tpu_custom_call.1} parent=0 // pred_check_branch
    %28 = sbr.rel (0) target = $region29
  $region28: #{tpu_custom_call.1} parent=0 // pred_region
    _
  $region29: #{tpu_custom_call.1} parent=0 // pred_fallthru
    _
  %v29 = vld [vmem:[%s0] sm:$0xff]
  %v30 = vld [vmem:[%s0 + $0x8] sm:$0xff]
  %v31 = vld [vmem:[%s0 + $0x10] sm:$0xff]
  %v32 = vld [vmem:[%s0 + $0x18] sm:$0xff]
  %v33 = vld [vmem:[%s0 + $0x20] sm:$0xff]
  %v34 = vld [vmem:[%s0 + $0x28] sm:$0xff]
  %v35 = vld [vmem:[%s0 + $0x30] sm:$0xff]
  %v36 = vld [vmem:[%s0 + $0x38] sm:$0xff]
  %v37 = vld [vmem:[%s1] sm:$0xff]
  %v38 = vld [vmem:[%s1 + $0x8] sm:$0xff]
  %v39 = vld [vmem:[%s1 + $0x10] sm:$0xff]
  %v40 = vld [vmem:[%s1 + $0x18] sm:$0xff]
  %v41 = vld [vmem:[%s1 + $0x20] sm:$0xff]
  %v42 = vld [vmem:[%s1 + $0x28] sm:$0xff]
  %v43 = vld [vmem:[%s1 + $0x30] sm:$0xff]
  %v44 = vld [vmem:[%s1 + $0x38] sm:$0xff]
  %v45 = vld [vmem:[%s2] sm:$0xff]
  %v46 = vld [vmem:[%s2 + $0x8] sm:$0xff]
  %v47 = vld [vmem:[%s2 + $0x10] sm:$0xff]
  %v48 = vld [vmem:[%s2 + $0x18] sm:$0xff]
  %vm49 = vcmask 261120
  %v51 = vsel %vm49, %v29, 0
  %v54 = vsel %vm49, %v30, 0
  %v57 = vsel %vm49, %v31, 0
  %v60 = vsel %vm49, %v32, 0
  %v63 = vsel %vm49, %v33, 0
  %v66 = vsel %vm49, %v34, 0
  %v69 = vsel %vm49, %v35, 0
  %v72 = vsel %vm49, %v36, 0
  %74 = vmatpush.msra.mxu0 0.0
  %75 = vmatpush.msra.mxu0 0.0
  %76 = vmatpush.msra.mxu0 0.0
  %77 = vmatpush.msra.mxu0 0.0
  %78 = vmatpush.msra.mxu0 0.0
  %79 = vmatpush.msra.mxu0 0.0
  %80 = vmatpush.msra.mxu0 0.0
  %81 = vmatpush.msra.mxu0 0.0
  %82 = vmatpush.msra.mxu0 0.0
  %83 = vmatpush.msra.mxu0 0.0
  %84 = vmatpush.msra.mxu0 0.0
  %85 = vmatpush.msra.mxu0 0.0
  %86 = vmatpush.msra.mxu0 %v48
  %87 = vmatpush.msra.mxu0 %v47
  %88 = vmatpush.msra.mxu0 %v46
  %89 = vmatpush.msra.mxu0 %v45
  %90 = vmatmul.f32.gmra.mxu0 %v51
  %v91 = vpop.f32.mrf.mxu0
  %v92 = vadd.f32 0.0, %v91
  %93 = vmatmul.f32.gmra.mxu0 %v54
  %v94 = vpop.f32.mrf.mxu0
  %v95 = vadd.f32 0.0, %v94
  %96 = vmatmul.f32.gmra.mxu0 %v57
  %v97 = vpop.f32.mrf.mxu0
  %v98 = vadd.f32 0.0, %v97
  %99 = vmatmul.f32.gmra.mxu0 %v60
  %v100 = vpop.f32.mrf.mxu0
  %v101 = vadd.f32 0.0, %v100
  %102 = vmatmul.f32.gmra.mxu0 %v63
  %v103 = vpop.f32.mrf.mxu0
  %v104 = vadd.f32 0.0, %v103
  %105 = vmatmul.f32.gmra.mxu0 %v66
  %v106 = vpop.f32.mrf.mxu0
  %v107 = vadd.f32 0.0, %v106
  %108 = vmatmul.f32.gmra.mxu0 %v69
  %v109 = vpop.f32.mrf.mxu0
  %v110 = vadd.f32 0.0, %v109
  %111 = vmatmul.f32.gmra.mxu0 %v72
  %v112 = vpop.f32.mrf.mxu0
  %v113 = vadd.f32 0.0, %v112
  %114 = vdwg.mxu0
  %vm115 = vcmask 64512
  %v116 = vsel %vm115, %v92, -inf
  %117 = vmax.xlane.f32.xlu0 %v116
  %v118 = vpop.xlane.xlu0 %117
  %v119 = vsel %vm115, %v95, -inf
  %120 = vmax.xlane.f32.xlu0 %v119
  %v121 = vpop.xlane.xlu0 %120
  %v122 = vsel %vm115, %v98, -inf
  %123 = vmax.xlane.f32.xlu0 %v122
  %v124 = vpop.xlane.xlu0 %123
  %v125 = vsel %vm115, %v101, -inf
  %126 = vmax.xlane.f32.xlu0 %v125
  %v127 = vpop.xlane.xlu0 %126
  %v128 = vsel %vm115, %v104, -inf
  %129 = vmax.xlane.f32.xlu0 %v128
  %v130 = vpop.xlane.xlu0 %129
  %v131 = vsel %vm115, %v107, -inf
  %132 = vmax.xlane.f32.xlu0 %v131
  %v133 = vpop.xlane.xlu0 %132
  %v134 = vsel %vm115, %v110, -inf
  %135 = vmax.xlane.f32.xlu0 %v134
  %v136 = vpop.xlane.xlu0 %135
  %v137 = vsel %vm115, %v113, -inf
  %138 = vmax.xlane.f32.xlu0 %v137
  %v139 = vpop.xlane.xlu0 %138
  %v140 = vsub.f32 %v92, %v118
  %v141 = vsub.f32 %v95, %v121
  %v142 = vsub.f32 %v98, %v124
  %v143 = vsub.f32 %v101, %v127
  %v144 = vsub.f32 %v104, %v130
  %v145 = vsub.f32 %v107, %v133
  %v146 = vsub.f32 %v110, %v136
  %v147 = vsub.f32 %v113, %v139
  %v148 = vmul.f32 %v140, 1.442695
  %v149 = vpow.pop %v148
  %v150 = vmul.f32 %v141, 1.442695
  %v151 = vpow.pop %v150
  %v152 = vmul.f32 %v142, 1.442695
  %v153 = vpow.pop %v152
  %v154 = vmul.f32 %v143, 1.442695
  %v155 = vpow.pop %v154
  %v156 = vmul.f32 %v144, 1.442695
  %v157 = vpow.pop %v156
  %v158 = vmul.f32 %v145, 1.442695
  %v159 = vpow.pop %v158
  %v160 = vmul.f32 %v146, 1.442695
  %v161 = vpow.pop %v160
  %v162 = vmul.f32 %v147, 1.442695
  %v163 = vpow.pop %v162
  %v164 = vsel %vm115, %v149, 0.0
  %165 = vadd.xlane.f32.xlu0 %v164
  %v166 = vpop.xlane.xlu0 %165
  %v167 = vsel %vm115, %v151, 0.0
  %168 = vadd.xlane.f32.xlu0 %v167
  %v169 = vpop.xlane.xlu0 %168
  %v170 = vsel %vm115, %v153, 0.0
  %171 = vadd.xlane.f32.xlu0 %v170
  %v172 = vpop.xlane.xlu0 %171
  %v173 = vsel %vm115, %v155, 0.0
  %174 = vadd.xlane.f32.xlu0 %v173
  %v175 = vpop.xlane.xlu0 %174
  %v176 = vsel %vm115, %v157, 0.0
  %177 = vadd.xlane.f32.xlu0 %v176
  %v178 = vpop.xlane.xlu0 %177
  %v179 = vsel %vm115, %v159, 0.0
  %180 = vadd.xlane.f32.xlu0 %v179
  %v181 = vpop.xlane.xlu0 %180
  %v182 = vsel %vm115, %v161, 0.0
  %183 = vadd.xlane.f32.xlu0 %v182
  %v184 = vpop.xlane.xlu0 %183
  %v185 = vsel %vm115, %v163, 0.0
  %186 = vadd.xlane.f32.xlu0 %v185
  %v187 = vpop.xlane.xlu0 %186
  %v188 = vrcp.pop %v166
  %v189 = vrcp.pop %v169
  %v190 = vrcp.pop %v172
  %v191 = vrcp.pop %v175
  %v192 = vrcp.pop %v178
  %v193 = vrcp.pop %v181
  %v194 = vrcp.pop %v184
  %v195 = vrcp.pop %v187
  %v196 = vmul.f32 %v149, %v188
  %v197 = vmul.f32 %v151, %v189
  %v198 = vmul.f32 %v153, %v190
  %v199 = vmul.f32 %v155, %v191
  %v200 = vmul.f32 %v157, %v192
  %v201 = vmul.f32 %v159, %v193
  %v202 = vmul.f32 %v161, %v194
  %v203 = vmul.f32 %v163, %v195
  %204 = vst.msk [vmem:[%s7] sm:$0xff] %vm115, %v196
  %205 = vst.msk [vmem:[%s7 + $0x8] sm:$0xff] %vm115, %v197
  %206 = vst.msk [vmem:[%s7 + $0x10] sm:$0xff] %vm115, %v198
  %207 = vst.msk [vmem:[%s7 + $0x18] sm:$0xff] %vm115, %v199
  %208 = vst.msk [vmem:[%s7 + $0x20] sm:$0xff] %vm115, %v200
  %209 = vst.msk [vmem:[%s7 + $0x28] sm:$0xff] %vm115, %v201
  %210 = vst.msk [vmem:[%s7 + $0x30] sm:$0xff] %vm115, %v202
  %211 = vst.msk [vmem:[%s7 + $0x38] sm:$0xff] %vm115, %v203
  %v212 = vld [vmem:[%s3] sm:$0xff]
  %v213 = vld [vmem:[%s3 + $0x8] sm:$0xff]
  %v214 = vld [vmem:[%s3 + $0x10] sm:$0xff]
  %v215 = vld [vmem:[%s3 + $0x18] sm:$0xff]
  %v216 = vld [vmem:[%s3 + $0x20] sm:$0xff]
  %v217 = vld [vmem:[%s3 + $0x28] sm:$0xff]
  %v218 = vld [vmem:[%s4] sm:$0x1]
  %v220 = vperm.slane %v218, 0
  %vm222 = vcmask 392192
  %v224 = vsel %vm222, %v37, 0
  %v227 = vsel %vm222, %v38, 0
  %v230 = vsel %vm222, %v39, 0
  %v233 = vsel %vm222, %v40, 0
  %v236 = vsel %vm222, %v41, 0
  %v239 = vsel %vm222, %v42, 0
  %v242 = vsel %vm222, %v43, 0
  %v245 = vsel %vm222, %v44, 0
  %247 = vmatpush.msra.mxu0 0.0
  %248 = vmatpush.msra.mxu0 0.0
  %249 = vmatpush.msra.mxu0 0.0
  %250 = vmatpush.msra.mxu0 0.0
  %251 = vmatpush.msra.mxu0 0.0
  %252 = vmatpush.msra.mxu0 0.0
  %253 = vmatpush.msra.mxu0 0.0
  %254 = vmatpush.msra.mxu0 0.0
  %255 = vmatpush.msra.mxu0 0.0
  %256 = vmatpush.msra.mxu0 0.0
  %257 = vmatpush.msra.mxu0 %v217
  %258 = vmatpush.msra.mxu0 %v216
  %259 = vmatpush.msra.mxu0 %v215
  %260 = vmatpush.msra.mxu0 %v214
  %261 = vmatpush.msra.mxu0 %v213
  %262 = vmatpush.msra.mxu0 %v212
  %263 = vmatmul.f32.gmra.mxu0 %v224
  %v264 = vpop.f32.mrf.mxu0
  %v265 = vadd.f32 %v220, %v264
  %266 = vmatmul.f32.gmra.mxu0 %v227
  %v267 = vpop.f32.mrf.mxu0
  %v268 = vadd.f32 %v220, %v267
  %269 = vmatmul.f32.gmra.mxu0 %v230
  %v270 = vpop.f32.mrf.mxu0
  %v271 = vadd.f32 %v220, %v270
  %272 = vmatmul.f32.gmra.mxu0 %v233
  %v273 = vpop.f32.mrf.mxu0
  %v274 = vadd.f32 %v220, %v273
  %275 = vmatmul.f32.gmra.mxu0 %v236
  %v276 = vpop.f32.mrf.mxu0
  %v277 = vadd.f32 %v220, %v276
  %278 = vmatmul.f32.gmra.mxu0 %v239
  %v279 = vpop.f32.mrf.mxu0
  %v280 = vadd.f32 %v220, %v279
  %281 = vmatmul.f32.gmra.mxu0 %v242
  %v282 = vpop.f32.mrf.mxu0
  %v283 = vadd.f32 %v220, %v282
  %284 = vmatmul.f32.gmra.mxu0 %v245
  %v285 = vpop.f32.mrf.mxu0
  %v286 = vadd.f32 %v220, %v285
  %287 = vdwg.mxu0
  %v288 = vld [vmem:[%s5] sm:$0xff]
  %v289 = vld [vmem:[%s5 + $0x8] sm:$0xff]
  %v290 = vld [vmem:[%s5 + $0x10] sm:$0xff]
  %v291 = vld [vmem:[%s5 + $0x18] sm:$0xff]
  %v292 = vld [vmem:[%s5 + $0x20] sm:$0xff]
  %v293 = vld [vmem:[%s5 + $0x28] sm:$0xff]
  %v294 = vld [vmem:[%s6] sm:$0x1]
  %v296 = vperm.slane %v294, 0
  %298 = vmatpush.msra.mxu0 0.0
  %299 = vmatpush.msra.mxu0 0.0
  %300 = vmatpush.msra.mxu0 0.0
  %301 = vmatpush.msra.mxu0 0.0
  %302 = vmatpush.msra.mxu0 0.0
  %303 = vmatpush.msra.mxu0 0.0
  %304 = vmatpush.msra.mxu0 0.0
  %305 = vmatpush.msra.mxu0 0.0
  %306 = vmatpush.msra.mxu0 0.0
  %307 = vmatpush.msra.mxu0 0.0
  %308 = vmatpush.msra.mxu0 %v293
  %309 = vmatpush.msra.mxu0 %v292
  %310 = vmatpush.msra.mxu0 %v291
  %311 = vmatpush.msra.mxu0 %v290
  %312 = vmatpush.msra.mxu0 %v289
  %313 = vmatpush.msra.mxu0 %v288
  %314 = vmatmul.f32.gmra.mxu0 %v224
  %v315 = vpop.f32.mrf.mxu0
  %v316 = vadd.f32 %v296, %v315
  %317 = vmatmul.f32.gmra.mxu0 %v227
  %v318 = vpop.f32.mrf.mxu0
  %v319 = vadd.f32 %v296, %v318
  %320 = vmatmul.f32.gmra.mxu0 %v230
  %v321 = vpop.f32.mrf.mxu0
  %v322 = vadd.f32 %v296, %v321
  %323 = vmatmul.f32.gmra.mxu0 %v233
  %v324 = vpop.f32.mrf.mxu0
  %v325 = vadd.f32 %v296, %v324
  %326 = vmatmul.f32.gmra.mxu0 %v236
  %v327 = vpop.f32.mrf.mxu0
  %v328 = vadd.f32 %v296, %v327
  %329 = vmatmul.f32.gmra.mxu0 %v239
  %v330 = vpop.f32.mrf.mxu0
  %v331 = vadd.f32 %v296, %v330
  %332 = vmatmul.f32.gmra.mxu0 %v242
  %v333 = vpop.f32.mrf.mxu0
  %v334 = vadd.f32 %v296, %v333
  %335 = vmatmul.f32.gmra.mxu0 %v245
  %v336 = vpop.f32.mrf.mxu0
  %v337 = vadd.f32 %v296, %v336
  %338 = vdwg.mxu0
  %v339 = vxor.u32 %v265, 2147483648
  %v340 = vxor.u32 %v268, 2147483648
  %v341 = vxor.u32 %v271, 2147483648
  %v342 = vxor.u32 %v274, 2147483648
  %v343 = vxor.u32 %v277, 2147483648
  %v344 = vxor.u32 %v280, 2147483648
  %v345 = vxor.u32 %v283, 2147483648
  %v346 = vxor.u32 %v286, 2147483648
  %v347 = vmul.f32 %v339, 1.442695
  %v348 = vpow.pop %v347
  %v349 = vmul.f32 %v340, 1.442695
  %v350 = vpow.pop %v349
  %v351 = vmul.f32 %v341, 1.442695
  %v352 = vpow.pop %v351
  %v353 = vmul.f32 %v342, 1.442695
  %v354 = vpow.pop %v353
  %v355 = vmul.f32 %v343, 1.442695
  %v356 = vpow.pop %v355
  %v357 = vmul.f32 %v344, 1.442695
  %v358 = vpow.pop %v357
  %v359 = vmul.f32 %v345, 1.442695
  %v360 = vpow.pop %v359
  %v361 = vmul.f32 %v346, 1.442695
  %v362 = vpow.pop %v361
  %v363 = vadd.f32 %v348, 1.0
  %v364 = vadd.f32 %v350, 1.0
  %v365 = vadd.f32 %v352, 1.0
  %v366 = vadd.f32 %v354, 1.0
  %v367 = vadd.f32 %v356, 1.0
  %v368 = vadd.f32 %v358, 1.0
  %v369 = vadd.f32 %v360, 1.0
  %v370 = vadd.f32 %v362, 1.0
  %v371 = vrcp.pop %v363
  %v372 = vmul.f32 %v363, %v371
  %v373 = vsub.f32 1.0, %v372
  %v374 = vmul.f32 %v371, %v373
  %v375 = vadd.f32 %v371, %v374
  %vm376 = vweird.f32 %v363
  %vm377 = vweird.f32 %v371
  %vm378 = vmor %vm376, %vm377
  %v379 = vsel %vm378, %v371, %v375
  %v380 = vand.u32 2147483647, %v363
  %vm381 = vcmp.eq.f32.partialorder %v380, 8.507059e+37
  %v382 = vand.u32 %v363, 2147483648
  %v383 = vor.u32 1.1754944e-38, %v382
  %v384 = vsel %vm381, %v383, %v379
  %v385 = vmul.f32 1.0, %v384
  %v386 = vrcp.pop %v364
  %v387 = vmul.f32 %v364, %v386
  %v388 = vsub.f32 1.0, %v387
  %v389 = vmul.f32 %v386, %v388
  %v390 = vadd.f32 %v386, %v389
  %vm391 = vweird.f32 %v364
  %vm392 = vweird.f32 %v386
  %vm393 = vmor %vm391, %vm392
  %v394 = vsel %vm393, %v386, %v390
  %v395 = vand.u32 2147483647, %v364
  %vm396 = vcmp.eq.f32.partialorder %v395, 8.507059e+37
  %v397 = vand.u32 %v364, 2147483648
  %v398 = vor.u32 1.1754944e-38, %v397
  %v399 = vsel %vm396, %v398, %v394
  %v400 = vmul.f32 1.0, %v399
  %v401 = vrcp.pop %v365
  %v402 = vmul.f32 %v365, %v401
  %v403 = vsub.f32 1.0, %v402
  %v404 = vmul.f32 %v401, %v403
  %v405 = vadd.f32 %v401, %v404
  %vm406 = vweird.f32 %v365
  %vm407 = vweird.f32 %v401
  %vm408 = vmor %vm406, %vm407
  %v409 = vsel %vm408, %v401, %v405
  %v410 = vand.u32 2147483647, %v365
  %vm411 = vcmp.eq.f32.partialorder %v410, 8.507059e+37
  %v412 = vand.u32 %v365, 2147483648
  %v413 = vor.u32 1.1754944e-38, %v412
  %v414 = vsel %vm411, %v413, %v409
  %v415 = vmul.f32 1.0, %v414
  %v416 = vrcp.pop %v366
  %v417 = vmul.f32 %v366, %v416
  %v418 = vsub.f32 1.0, %v417
  %v419 = vmul.f32 %v416, %v418
  %v420 = vadd.f32 %v416, %v419
  %vm421 = vweird.f32 %v366
  %vm422 = vweird.f32 %v416
  %vm423 = vmor %vm421, %vm422
  %v424 = vsel %vm423, %v416, %v420
  %v425 = vand.u32 2147483647, %v366
  %vm426 = vcmp.eq.f32.partialorder %v425, 8.507059e+37
  %v427 = vand.u32 %v366, 2147483648
  %v428 = vor.u32 1.1754944e-38, %v427
  %v429 = vsel %vm426, %v428, %v424
  %v430 = vmul.f32 1.0, %v429
  %v431 = vrcp.pop %v367
  %v432 = vmul.f32 %v367, %v431
  %v433 = vsub.f32 1.0, %v432
  %v434 = vmul.f32 %v431, %v433
  %v435 = vadd.f32 %v431, %v434
  %vm436 = vweird.f32 %v367
  %vm437 = vweird.f32 %v431
  %vm438 = vmor %vm436, %vm437
  %v439 = vsel %vm438, %v431, %v435
  %v440 = vand.u32 2147483647, %v367
  %vm441 = vcmp.eq.f32.partialorder %v440, 8.507059e+37
  %v442 = vand.u32 %v367, 2147483648
  %v443 = vor.u32 1.1754944e-38, %v442
  %v444 = vsel %vm441, %v443, %v439
  %v445 = vmul.f32 1.0, %v444
  %v446 = vrcp.pop %v368
  %v447 = vmul.f32 %v368, %v446
  %v448 = vsub.f32 1.0, %v447
  %v449 = vmul.f32 %v446, %v448
  %v450 = vadd.f32 %v446, %v449
  %vm451 = vweird.f32 %v368
  %vm452 = vweird.f32 %v446
  %vm453 = vmor %vm451, %vm452
  %v454 = vsel %vm453, %v446, %v450
  %v455 = vand.u32 2147483647, %v368
  %vm456 = vcmp.eq.f32.partialorder %v455, 8.507059e+37
  %v457 = vand.u32 %v368, 2147483648
  %v458 = vor.u32 1.1754944e-38, %v457
  %v459 = vsel %vm456, %v458, %v454
  %v460 = vmul.f32 1.0, %v459
  %v461 = vrcp.pop %v369
  %v462 = vmul.f32 %v369, %v461
  %v463 = vsub.f32 1.0, %v462
  %v464 = vmul.f32 %v461, %v463
  %v465 = vadd.f32 %v461, %v464
  %vm466 = vweird.f32 %v369
  %vm467 = vweird.f32 %v461
  %vm468 = vmor %vm466, %vm467
  %v469 = vsel %vm468, %v461, %v465
  %v470 = vand.u32 2147483647, %v369
  %vm471 = vcmp.eq.f32.partialorder %v470, 8.507059e+37
  %v472 = vand.u32 %v369, 2147483648
  %v473 = vor.u32 1.1754944e-38, %v472
  %v474 = vsel %vm471, %v473, %v469
  %v475 = vmul.f32 1.0, %v474
  %v476 = vrcp.pop %v370
  %v477 = vmul.f32 %v370, %v476
  %v478 = vsub.f32 1.0, %v477
  %v479 = vmul.f32 %v476, %v478
  %v480 = vadd.f32 %v476, %v479
  %vm481 = vweird.f32 %v370
  %vm482 = vweird.f32 %v476
  %vm483 = vmor %vm481, %vm482
  %v484 = vsel %vm483, %v476, %v480
  %v485 = vand.u32 2147483647, %v370
  %vm486 = vcmp.eq.f32.partialorder %v485, 8.507059e+37
  %v487 = vand.u32 %v370, 2147483648
  %v488 = vor.u32 1.1754944e-38, %v487
  %v489 = vsel %vm486, %v488, %v484
  %v490 = vmul.f32 1.0, %v489
  %491 = vst.msk [vmem:[%s8] sm:$0xff] %vm49, %v385
  %492 = vst.msk [vmem:[%s8 + $0x8] sm:$0xff] %vm49, %v400
  %493 = vst.msk [vmem:[%s8 + $0x10] sm:$0xff] %vm49, %v415
  %494 = vst.msk [vmem:[%s8 + $0x18] sm:$0xff] %vm49, %v430
  %495 = vst.msk [vmem:[%s8 + $0x20] sm:$0xff] %vm49, %v445
  %496 = vst.msk [vmem:[%s8 + $0x28] sm:$0xff] %vm49, %v460
  %497 = vst.msk [vmem:[%s8 + $0x30] sm:$0xff] %vm49, %v475
  %498 = vst.msk [vmem:[%s8 + $0x38] sm:$0xff] %vm49, %v490
  %v499 = vtanh.pop %v316
  %v500 = vtanh.pop %v319
  %v501 = vtanh.pop %v322
  %v502 = vtanh.pop %v325
  %v503 = vtanh.pop %v328
  %v504 = vtanh.pop %v331
  %v505 = vtanh.pop %v334
  %v506 = vtanh.pop %v337
  %507 = vst.msk [vmem:[%s9] sm:$0xff] %vm49, %v499
  %508 = vst.msk [vmem:[%s9 + $0x8] sm:$0xff] %vm49, %v500
  %509 = vst.msk [vmem:[%s9 + $0x10] sm:$0xff] %vm49, %v501
  %510 = vst.msk [vmem:[%s9 + $0x18] sm:$0xff] %vm49, %v502
  %511 = vst.msk [vmem:[%s9 + $0x20] sm:$0xff] %vm49, %v503
  %512 = vst.msk [vmem:[%s9 + $0x28] sm:$0xff] %vm49, %v504
  %513 = vst.msk [vmem:[%s9 + $0x30] sm:$0xff] %vm49, %v505
  %514 = vst.msk [vmem:[%s9 + $0x38] sm:$0xff] %vm49, %v506
  // Predicated region
  $region30: #{tpu_custom_call.1} parent=0 // pred_check
    _
  $region31: #{tpu_custom_call.1} parent=0 // pred_check_branch
    %516 = sbr.rel (0) target = $region33
  $region32: #{tpu_custom_call.1} parent=0 // pred_region
    _
  $region33: #{tpu_custom_call.1} parent=0 // pred_fallthru
    _
  // Predicated region
  $region34: #{tpu_custom_call.1} parent=0 // pred_check
    _
  $region35: #{tpu_custom_call.1} parent=0 // pred_check_branch
    %518 = sbr.rel (0) target = $region37
  $region36: #{tpu_custom_call.1} parent=0 // pred_region
    _
  $region37: #{tpu_custom_call.1} parent=0 // pred_fallthru
    _
  // Predicated region
  $region38: #{tpu_custom_call.1} parent=0 // pred_check
    _
  $region39: #{tpu_custom_call.1} parent=0 // pred_check_branch
    %520 = sbr.rel (0) target = $region41
  $region40: #{tpu_custom_call.1} parent=0 // pred_region
    _
  $region41: #{tpu_custom_call.1} parent=0 // pred_fallthru
    _
  // Predicated region
  $region42: #{tpu_custom_call.1} parent=0 // pred_check
    _
  $region43: #{tpu_custom_call.1} parent=0 // pred_check_branch
    %522 = sbr.rel (0) target = $region45
  $region44: #{tpu_custom_call.1} parent=0 // pred_region
    _
  $region45: #{tpu_custom_call.1} parent=0 // pred_fallthru
    _
  // Predicated region
  $region46: #{tpu_custom_call.1} parent=0 // pred_check
    _
  $region47: #{tpu_custom_call.1} parent=0 // pred_check_branch
    %524 = sbr.rel (0) target = $region49
  $region48: #{tpu_custom_call.1} parent=0 // pred_region
    _
  $region49: #{tpu_custom_call.1} parent=0 // pred_fallthru
    _
  // Predicated region
  $region50: #{tpu_custom_call.1} parent=0 // pred_check
    _
  $region51: #{tpu_custom_call.1} parent=0 // pred_check_branch
    %526 = sbr.rel (0) target = $region53
  $region52: #{tpu_custom_call.1} parent=0 // pred_region
    _
  $region53: #{tpu_custom_call.1} parent=0 // pred_fallthru
    _

</llo_original>
